<compile_context>
chip_gen: v6e
topology: v6e:2x2x1
jax: 0.10.0
libtpu: 0.0.40
codegen_flags: <defaults>
</compile_context>

<pallas_src>
import jax
import jax.numpy as jnp
from jax.experimental import pallas as pl
from jax.experimental.pallas import tpu as pltpu


# ------------------------- Pallas kernel (hot path) -------------------------

def _linear_relu_kernel(x_ref, w_ref, b_ref, o_ref, acc_ref):
    """One (TILE_M, N) output tile; contraction K is grid axis 1."""
    k = pl.program_id(1)

    @pl.when(k == 0)
    def _():
        acc_ref[...] = jnp.zeros_like(acc_ref)

    # bf16 x bf16 -> f32 accumulation on the MXU.
    acc_ref[...] += jnp.dot(x_ref[...], w_ref[...],
                            preferred_element_type=jnp.float32)

    @pl.when(k == pl.num_programs(1) - 1)
    def _():
        y = acc_ref[...] + b_ref[...]              # (TILE_M, N) + (1, N), f32
        o_ref[...] = jnp.maximum(y, 0.0).astype(o_ref.dtype)


def _round_up(x, m):
    return ((x + m - 1) // m) * m


def linear_relu_pallas(x2d, w, b, *, tile_m=256, tile_k=None):
    """Y = relu(X @ W + b).

    X:(M,H) bf16, W:(H,N) bf16, b:(1,N) f32 -> Y:(M,N) f32.
    Requires H % 128 == 0 and N % 128 == 0 (lane-dense output).
    M is zero-padded up to a multiple of tile_m internally.
    """
    M, H = x2d.shape
    N = w.shape[1]
    assert H % 128 == 0, "contraction dim must be a multiple of 128"
    assert N % 128 == 0, "output width must be lane-dense (multiple of 128)"

    # Single K step when the full contraction fits comfortably; otherwise
    # 256-wide K tiles (multiple of 128, MXU friendly).
    if tile_k is None:
        tile_k = H if H <= 512 else 256
        while H % tile_k:
            tile_k -= 128
    assert H % tile_k == 0

    tile_m = min(tile_m, _round_up(M, 8))
    Mp = _round_up(M, tile_m)
    if Mp != M:
        x2d = jnp.pad(x2d, ((0, Mp - M), (0, 0)))

    grid = (Mp // tile_m, H // tile_k)             # (parallel M, arbitrary K)

    flops = 2 * Mp * H * N
    bytes_accessed = (x2d.size * x2d.dtype.itemsize
                      + w.size * w.dtype.itemsize
                      + b.size * b.dtype.itemsize
                      + Mp * N * 4)

    out = pl.pallas_call(
        _linear_relu_kernel,
        out_shape=jax.ShapeDtypeStruct((Mp, N), jnp.float32),
        grid=grid,
        in_specs=[
            pl.BlockSpec((tile_m, tile_k), lambda i, k: (i, k)),   # X tile
            pl.BlockSpec((tile_k, N),      lambda i, k: (k, 0)),   # W tile
            pl.BlockSpec((1, N),           lambda i, k: (0, 0)),   # bias pinned
        ],
        # Output tile fixed across K -> resident target; written only on the
        # final K step (inside pl.when above).
        out_specs=pl.BlockSpec((tile_m, N), lambda i, k: (i, 0)),
        scratch_shapes=[pltpu.VMEM((tile_m, N), jnp.float32)],
        compiler_params=pltpu.CompilerParams(
            dimension_semantics=("parallel", "arbitrary"),
            vmem_limit_bytes=32 * 1024 * 1024,     # safe on v5e/v6e/v7x
        ),
        cost_estimate=pl.CostEstimate(
            flops=flops, transcendentals=0, bytes_accessed=bytes_accessed),
    )(x2d, w, b)

    if Mp != M:
        out = out[:M]
    return out


# ----------------------- Synthetic wrapped "module" -------------------------

class LinearReLUModule:
    """Stand-in for the arbitrary nn.Module that BaseModel wraps."""

    _MIN_PALLAS_DIM = 128   # below this a Pallas call is pure launch overhead

    def __init__(self, hidden, out, key):
        kw, kb = jax.random.split(key)
        # Deterministic synthetic parameter init (no checkpoint load).
        self.w = (jax.random.normal(kw, (hidden, out), jnp.float32)
                  * (1.0 / jnp.sqrt(hidden)))
        self.b = jax.random.normal(kb, (1, out), jnp.float32) * 0.01
        # bf16 copy feeds the MXU; accumulation stays f32 inside the kernel.
        self.w_bf16 = self.w.astype(jnp.bfloat16)

    def __call__(self, x):
        # x: (B, S, H) -> reshape glue in plain JAX, matmul+bias+relu in Pallas.
        B, S, H = x.shape
        N = self.w.shape[1]
        M = B * S
        x2d = x.reshape(M, H)
        if min(M, H, N) < self._MIN_PALLAS_DIM or H % 128 or N % 128:
            # Too small / misaligned: XLA's fused dot+bias+relu wins here.
            y2d = jnp.maximum(x2d @ self.w + self.b, 0.0)
        else:
            y2d = linear_relu_pallas(x2d.astype(jnp.bfloat16),
                                     self.w_bf16, self.b)
        return y2d.reshape(B, S, N)


# ---------------------------- BaseModel wrapper -----------------------------

class BaseModel:
    """Faithful port of the PyTorch BaseModel forward: pure delegation."""

    def __init__(self, opt, module):
        self.opt = opt
        self.model = module

    def forward(self, *inputs, **kwargs):
        outputs = self.model(*inputs, **kwargs)
        return outputs

    __call__ = forward

    # TODO(synk): save_pretrained / from_pretrained are torch checkpoint I/O
    # (torch.save / torch.load + state-dict alignment) and are not reproduced.


# ---------------------------------- main ------------------------------------

if __name__ == "__main__":
    key = jax.random.PRNGKey(0)
    k_x, k_p = jax.random.split(key)

    # M = B*S = 512 rows, H = N = 256: lane-dense, exercises a (2, 1..2) grid
    # (two parallel M tiles; K handled by the adaptive tile_k policy).
    B, S, H, N = 2, 256, 256, 256
    x = jax.random.normal(k_x, (B, S, H), jnp.float32)

    module = LinearReLUModule(H, N, k_p)
    model = BaseModel(opt={"device": "tpu"}, module=module)

    out = jax.block_until_ready(model(x))
    assert out.shape == (B, S, N)

    # Reference with matching bf16-operand / f32-accumulation semantics.
    x2d_bf16 = x.reshape(B * S, H).astype(jnp.bfloat16)
    ref = jnp.maximum(
        jnp.dot(x2d_bf16, module.w_bf16, preferred_element_type=jnp.float32)
        + module.b, 0.0).reshape(B, S, N)
    assert jnp.allclose(out, ref, atol=1e-2, rtol=1e-2)

    # Also check the small/misaligned fallback path (delegation semantics only).
    x_small = jax.random.normal(k_x, (2, 8, 256), jnp.float32)[..., :200]
    module_small = LinearReLUModule(200, 96, k_p)
    out_small = jax.block_until_ready(BaseModel({}, module_small)(x_small))
    ref_small = jnp.maximum(
        x_small.reshape(16, 200) @ module_small.w + module_small.b, 0.0
    ).reshape(2, 8, 96)
    assert jnp.allclose(out_small, ref_small, atol=1e-4, rtol=1e-4)

    print("KERNEL_OK")
</pallas_src>

<mosaic_0001>
module attributes {stable_mosaic.version = 11 : i64} {
  func.func @_linear_relu_kernel(%arg0: i32, %arg1: i32, %arg2: memref<256x256xbf16, #tpu.memory_space<vmem>>, %arg3: memref<256x256xbf16, #tpu.memory_space<vmem>>, %arg4: memref<1x256xf32, #tpu.memory_space<vmem>>, %arg5: memref<256x256xf32, #tpu.memory_space<vmem>>, %arg6: memref<256x256xf32, #tpu.memory_space<vmem>>) attributes {dimension_semantics = [#tpu.dimension_semantics<parallel>, #tpu.dimension_semantics<arbitrary>], iteration_bounds = array<i64: 2, 1>, scalar_prefetch = 0 : i64, scratch_operands = 1 : i64, tpu.core_type = #tpu.core_type<tc>, window_params = [{transform_indices = @transform_0, window_bounds = array<i64: 256, 256>}, {transform_indices = @transform_1, window_bounds = array<i64: 256, 256>}, {pipeline_mode = #tpu.pipeline_mode<synchronous>, transform_indices = @transform_2, window_bounds = array<i64: 1, 256>}, {transform_indices = @transform_3, window_bounds = array<i64: 256, 256>}]} {
    %c0_i32 = arith.constant 0 : i32
    %0 = arith.cmpi eq, %arg1, %c0_i32 : i32
    %1 = arith.extui %0 : i1 to i32
    %c0_i32_0 = arith.constant 0 : i32
    %2 = arith.cmpi ne, %1, %c0_i32_0 : i32
    scf.if %2 {
      %cst_10 = arith.constant 0.000000e+00 : f32
      %12 = vector.broadcast %cst_10 : f32 to vector<256x256xf32>
      %c0_11 = arith.constant 0 : index
      %c0_12 = arith.constant 0 : index
      %13 = vector.load %arg6[%c0_11, %c0_12] : memref<256x256xf32, #tpu.memory_space<vmem>>, vector<256x256xf32>
      tpu.vector_store %arg6[%c0_11, %c0_12], %12 {strides = array<i32>} : memref<256x256xf32, #tpu.memory_space<vmem>>, vector<256x256xf32>,
    } else {
    }
    %c0 = arith.constant 0 : index
    %c0_1 = arith.constant 0 : index
    %3 = vector.load %arg6[%c0, %c0_1] : memref<256x256xf32, #tpu.memory_space<vmem>>, vector<256x256xf32>
    %c0_2 = arith.constant 0 : index
    %c0_3 = arith.constant 0 : index
    %4 = vector.load %arg2[%c0_2, %c0_3] : memref<256x256xbf16, #tpu.memory_space<vmem>>, vector<256x256xbf16>
    %c0_4 = arith.constant 0 : index
    %c0_5 = arith.constant 0 : index
    %5 = vector.load %arg3[%c0_4, %c0_5] : memref<256x256xbf16, #tpu.memory_space<vmem>>, vector<256x256xbf16>
    %cst = arith.constant dense<0.000000e+00> : vector<256x256xf32>
    %6 = tpu.matmul %4, %5, %cst {dimension_numbers = #tpu.dot_dimension_numbers<[1], [0], [0], [1], [0, 0, 1, 1], [], []>} : vector<256x256xbf16>, vector<256x256xbf16>, vector<256x256xf32> -> vector<256x256xf32>
    %7 = arith.addf %3, %6 : vector<256x256xf32>
    %c0_6 = arith.constant 0 : index
    %c0_7 = arith.constant 0 : index
    %8 = vector.load %arg6[%c0_6, %c0_7] : memref<256x256xf32, #tpu.memory_space<vmem>>, vector<256x256xf32>
    tpu.vector_store %arg6[%c0_6, %c0_7], %7 {strides = array<i32>} : memref<256x256xf32, #tpu.memory_space<vmem>>, vector<256x256xf32>,
    %c0_i32_8 = arith.constant 0 : i32
    %9 = arith.cmpi eq, %arg1, %c0_i32_8 : i32
    %10 = arith.extui %9 : i1 to i32
    %c0_i32_9 = arith.constant 0 : i32
    %11 = arith.cmpi ne, %10, %c0_i32_9 : i32
    scf.if %11 {
      %c0_10 = arith.constant 0 : index
      %c0_11 = arith.constant 0 : index
      %12 = vector.load %arg6[%c0_10, %c0_11] : memref<256x256xf32, #tpu.memory_space<vmem>>, vector<256x256xf32>
      %c0_12 = arith.constant 0 : index
      %c0_13 = arith.constant 0 : index
      %13 = vector.load %arg4[%c0_12, %c0_13] : memref<1x256xf32, #tpu.memory_space<vmem>>, vector<1x256xf32>
      %14 = vector.broadcast %13 : vector<1x256xf32> to vector<256x256xf32>
      %15 = arith.addf %12, %14 : vector<256x256xf32>
      %cst_14 = arith.constant 0.000000e+00 : f32
      %16 = vector.broadcast %cst_14 : f32 to vector<256x256xf32>
      %17 = arith.maximumf %15, %16 : vector<256x256xf32>
      %c0_15 = arith.constant 0 : index
      %c0_16 = arith.constant 0 : index
      %18 = vector.load %arg5[%c0_15, %c0_16] : memref<256x256xf32, #tpu.memory_space<vmem>>, vector<256x256xf32>
      tpu.vector_store %arg5[%c0_15, %c0_16], %17 {strides = array<i32>} : memref<256x256xf32, #tpu.memory_space<vmem>>, vector<256x256xf32>,
    } else {
    }
    return
  }
  func.func @transform_0(%arg0: i32, %arg1: i32) -> (i32, i32) {
    %c0_i32 = arith.constant 0 : i32
    return %arg0, %arg1 : i32, i32
  }
  func.func @transform_1(%arg0: i32, %arg1: i32) -> (i32, i32) {
    %c0_i32 = arith.constant 0 : i32
    %c0_i32_0 = arith.constant 0 : i32
    return %arg1, %c0_i32 : i32, i32
  }
  func.func @transform_2(%arg0: i32, %arg1: i32) -> (i32, i32) {
    %c0_i32 = arith.constant 0 : i32
    %c0_i32_0 = arith.constant 0 : i32
    %c0_i32_1 = arith.constant 0 : i32
    return %c0_i32, %c0_i32_0 : i32, i32
  }
  func.func @transform_3(%arg0: i32, %arg1: i32) -> (i32, i32) {
    %c0_i32 = arith.constant 0 : i32
    %c0_i32_0 = arith.constant 0 : i32
    return %arg0, %c0_i32 : i32, i32
  }
}

</mosaic_0001>

<llo_original>
// kernel: tpu_custom_call.1
$region0: #{tpu_custom_call.1}
  #allocation0 [shape = 'u32[]', space=smem, size = 0x4, offset = 0x4, fixed_abs, tag = 'smem constant byte address 0x4 - core index']
  #allocation1 [shape = 'u32[144,128]{1,0:T(1,128)}', space=vmem, size = 0x12000, scoped, tag = 'internal scratch']
  #allocation2 [shape = 'f32[256,256]{1,0:T(8,128)}', space=vmem, size = 0x40000, scoped, tag = 'scratch operand']
  %s0 = inlined_call_operand.hbm [shape: bf16[512,256], index: 0, kind: input, shape index: {}]
  %s1 = inlined_call_operand.hbm [shape: bf16[256,256], index: 1, kind: input, shape index: {}]
  %s2 = inlined_call_operand.vmem [shape: f32[1,256], index: 2, kind: input, shape index: {}]
  %s3 = inlined_call_operand.hbm [shape: f32[512,256], index: 3, kind: output, shape index: {}]
  %s4 = sld [smem:[#allocation0]]
  $region61: #{tpu_custom_call.1} parent=0
    _
  %s6 = ssub.s32 1, %s4
  %s7 = scalar_select 0, %s6, %s4
  $region1: #{tpu_custom_call.1} parent=0
    #allocation3 [shape = 'u8[262144]{0}', space=vmem, size = 0x40000, scoped, tag = 'input window, operand 0']
    #allocation4 [shape = 's32[2]{0}', space=sflag, size = 0x8, scoped, tag = 'scoped memory for tpu_custom_call.1']
    #allocation5 [shape = 's32[2]{0}', space=sflag, size = 0x8, scoped, tag = 'scoped memory for tpu_custom_call.1']
    #allocation6 [shape = 'u8[131072]{0}', space=vmem, size = 0x20000, scoped, tag = 'input window, operand 1, single buffered']
    #allocation7 [shape = 's32[1]{0}', space=sflag, size = 0x4, scoped, tag = 'scoped memory for tpu_custom_call.1']
    #allocation8 [shape = 'u8[524288]{0}', space=vmem, size = 0x80000, scoped, tag = 'output window, operand 0']
    %8 = vsyncpa [#allocation4], 0
    %s9 = scalar_lea.sflag [#allocation4], 1
    %10 = vsyncpa %s9, 0
    %11 = vsyncpa [#allocation7], 0
    %12 = vsyncpa [#allocation5], 0
    %s13 = scalar_lea.sflag [#allocation5], 1
    %14 = vsyncpa %s13, 0
    loop: start=0, step=1, limit=4
    $region2: #{tpu_custom_call.1} parent=1 // loop_pre_header
      _
    $region3: #{tpu_custom_call.1} parent=1 // loop_header
      %s16 = sphi 0, %s20
      %p17 = scmp.ge.s32.totalorder %s16, 4
      %s23 = sphi 0, %s35
      %s24 = sphi 0, %s31
      %s25 = sphi 0, %s23
      %s26 = sphi 0, %s24
      %s27 = sphi 0, %s25
      %s28 = sphi 0, %s26
      %s40 = sphi 0, %s42
      %s43 = sphi 0, %s40
      %s44 = sphi 0, %s43
      %s60 = sphi 0, %s44
      %s66 = sphi 0, %s68
      %s69 = sphi 0, %s66
      %s70 = sphi 0, %s69
      %s86 = sphi 0, %s70
      %s90 = sphi 0, %s90
      %s92 = sphi 0, %s90
      %s93 = sphi 0, %s92
      %s107 = sphi 0, %s93
      %s113 = sphi 0, %s115
      %s116 = sphi 0, %s113
      %s117 = sphi 0, %s116
      %s133 = sphi 0, %s117
    $region4: #{tpu_custom_call.1} parent=1 // loop_header_branch
      %19 = sbr.rel (%p17) target = $region8
    $region5: #{tpu_custom_call.1} parent=1 // loop_body
      %s21 = ssub.s32 %s16, 1
      %s22 = ssub.s32 %s16, 2
      %s29 = sadd.s32 1, %s24
      %p30 = scmp.ge.s32.totalorder %s29, 1
      %s31 = scalar_select %p30, 0, %s29
      %s32 = sadd.s32 1, %s23
      %s33 = scalar_select %p30, %s32, %s23
      %p34 = scmp.ge.s32.totalorder %s33, 2
      %s35 = scalar_select %p34, 0, %s33
      %s36 = ssub.s32 %s23, %s35
      %s37 = ssub.s32 %s24, %s31
      %s38 = sor.u32 %s36, %s37
      %p39 = scmp.eq.s32.totalorder %s38, 0
      %s41 = sadd.s32 %s40, 1
      %s42 = scalar_select %p39, %s40, %s41
      %p45 = pneg %p39
      %p46 = scmp.eq.s32.totalorder %s16, 1
      %p47 = por %p45, %p46
      %p48 = scmp.ne.s32.totalorder %s40, %s43
      %p49 = scmp.eq.s32.totalorder %s16, 0
      %p50 = por %p48, %p49
      %p51 = scmp.ne.s32.totalorder %s40, %s43
      %p52 = scmp.eq.s32.totalorder %s21, 1
      %p53 = por %p51, %p52
      %p54 = scmp.ne.s32.totalorder %s43, %s44
      %p55 = scmp.eq.s32.totalorder %s21, 0
      %p56 = por %p54, %p55
      %p57 = scmp.ne.s32.totalorder %s43, %s44
      %p58 = scmp.eq.s32.totalorder %s22, 1
      %p59 = por %p57, %p58
      %p61 = scmp.ne.s32.totalorder %s44, %s60
      %p62 = scmp.eq.s32.totalorder %s22, 0
      %p63 = por %p61, %p62
      %s64 = ssub.s32 %s24, %s31
      %p65 = scmp.eq.s32.totalorder %s64, 0
      %s67 = sadd.s32 %s66, 1
      %s68 = scalar_select %p65, %s66, %s67
      %p71 = pneg %p65
      %p72 = scmp.eq.s32.totalorder %s16, 1
      %p73 = por %p71, %p72
      %p74 = scmp.ne.s32.totalorder %s66, %s69
      %p75 = scmp.eq.s32.totalorder %s16, 0
      %p76 = por %p74, %p75
      %p77 = scmp.ne.s32.totalorder %s66, %s69
      %p78 = scmp.eq.s32.totalorder %s21, 1
      %p79 = por %p77, %p78
      %p80 = scmp.ne.s32.totalorder %s69, %s70
      %p81 = scmp.eq.s32.totalorder %s21, 0
      %p82 = por %p80, %p81
      %p83 = scmp.ne.s32.totalorder %s69, %s70
      %p84 = scmp.eq.s32.totalorder %s22, 1
      %p85 = por %p83, %p84
      %p87 = scmp.ne.s32.totalorder %s70, %s86
      %p88 = scmp.eq.s32.totalorder %s22, 0
      %p89 = por %p87, %p88
      %s91 = sadd.s32 %s90, 1
      %p94 = scmp.eq.s32.totalorder %s16, 1
      %p95 = scmp.ne.s32.totalorder %s90, %s92
      %p96 = scmp.eq.s32.totalorder %s16, 0
      %p97 = por %p95, %p96
      %p98 = scmp.ne.s32.totalorder %s90, %s92
      %p99 = scmp.eq.s32.totalorder %s21, 1
      %p100 = por %p98, %p99
      %p101 = scmp.ne.s32.totalorder %s92, %s93
      %p102 = scmp.eq.s32.totalorder %s21, 0
      %p103 = por %p101, %p102
      %p104 = scmp.ne.s32.totalorder %s92, %s93
      %p105 = scmp.eq.s32.totalorder %s22, 1
      %p106 = por %p104, %p105
      %p108 = scmp.ne.s32.totalorder %s93, %s107
      %p109 = scmp.eq.s32.totalorder %s22, 0
      %p110 = por %p108, %p109
      %s111 = ssub.s32 %s23, %s35
      %p112 = scmp.eq.s32.totalorder %s111, 0
      %s114 = sadd.s32 %s113, 1
      %s115 = scalar_select %p112, %s113, %s114
      %p118 = pneg %p112
      %p119 = scmp.eq.s32.totalorder %s16, 1
      %p120 = por %p118, %p119
      %p121 = scmp.ne.s32.totalorder %s113, %s116
      %p122 = scmp.eq.s32.totalorder %s16, 0
      %p123 = por %p121, %p122
      %p124 = scmp.ne.s32.totalorder %s113, %s116
      %p125 = scmp.eq.s32.totalorder %s21, 1
      %p126 = por %p124, %p125
      %p127 = scmp.ne.s32.totalorder %s116, %s117
      %p128 = scmp.eq.s32.totalorder %s21, 0
      %p129 = por %p127, %p128
      %p130 = scmp.ne.s32.totalorder %s116, %s117
      %p131 = scmp.eq.s32.totalorder %s22, 1
      %p132 = por %p130, %p131
      %p134 = scmp.ne.s32.totalorder %s117, %s133
      %p135 = scmp.eq.s32.totalorder %s22, 0
      %p136 = por %p134, %p135
      %p137 = scmp.le.s32.totalorder 1, %s16
      %p138 = scmp.lt.s32.totalorder %s16, 3
      %p139 = pnand %p137, %p138
      %p140 = pneg %p139
      // Predicated region
      $region9: #{tpu_custom_call.1} parent=5 // pred_check
        _
      $region10: #{tpu_custom_call.1} parent=5 // pred_check_branch
        %142 = sbr.rel (%p139) target = $region12
      $region11: #{tpu_custom_call.1} parent=5 // pred_region
        %s143 = ssub.s32 %s16, 1
        // Predicated region
        $region13: #{tpu_custom_call.1} parent=11 // pred_check
          %p144 = pneg %p82
        $region14: #{tpu_custom_call.1} parent=11 // pred_check_branch
          %146 = sbr.rel (%p144) target = $region16
        $region15: #{tpu_custom_call.1} parent=11 // pred_region
          %s147 = smul.u32 32, %s26
          %s149 = ssub.s32 4096, 4096
          %150 = vsyncadd [#allocation7], %s149
          %s151 = smul.addr %s147, 2
          %s152 = smul.addr %s151, 64
          %s153 = scalar_lea.hbm %s1, %s152
          %s154 = sshll.u32 [#allocation6], 4
          %s155 = int_to_ptr.vmem [resolvable:$true] %s154
          %160 = dma.hbm_to_vmem [thread:$0]  %s153, 4096, %s155, [#allocation7], 128, 128, 8
        $region16: #{tpu_custom_call.1} parent=11 // pred_fallthru
          _
        // Predicated region
        $region17: #{tpu_custom_call.1} parent=11 // pred_check
          %p161 = pneg %p103
        $region18: #{tpu_custom_call.1} parent=11 // pred_check_branch
          %163 = sbr.rel (%p161) target = $region20
        $region19: #{tpu_custom_call.1} parent=11 // pred_region
          _
        $region20: #{tpu_custom_call.1} parent=11 // pred_fallthru
          _
      $region12: #{tpu_custom_call.1} parent=5 // pred_fallthru
        _
      %p164 = scmp.lt.s32.totalorder %s16, 2
      // Predicated region
      $region21: #{tpu_custom_call.1} parent=5 // pred_check
        %p165 = pneg %p164
      $region22: #{tpu_custom_call.1} parent=5 // pred_check_branch
        %167 = sbr.rel (%p165) target = $region24
      $region23: #{tpu_custom_call.1} parent=5 // pred_region
        // Predicated region
        $region25: #{tpu_custom_call.1} parent=23 // pred_check
          %p168 = pneg %p50
        $region26: #{tpu_custom_call.1} parent=23 // pred_check_branch
          %170 = sbr.rel (%p168) target = $region28
        $region27: #{tpu_custom_call.1} parent=23 // pred_region
          %s171 = sand.u32 %s40, 1
          %s172 = scalar_lea.sflag [#allocation4], %s171
          %s173 = sand.u32 %s40, 1
          %s174 = smul.addr %s173, 256
          %s175 = scalar_lea.vmem [#allocation3], %s174
          %s176 = smul.u32 32, %s23
          %s177 = smul.u32 2, %s24
          %s179 = ssub.s32 4096, 4096
          %180 = vsyncadd %s172, %s179
          %s181 = smul.addr %s176, 2
          %s182 = sadd.s32 %s177, %s181
          %s183 = smul.addr %s182, 64
          %s184 = scalar_lea.hbm %s0, %s183
          %s185 = sshll.u32 %s175, 4
          %s186 = int_to_ptr.vmem [resolvable:$true] %s185
          %191 = dma.hbm_to_vmem [thread:$0]  %s184, 4096, %s186, %s172, 128, 128, 8
        $region28: #{tpu_custom_call.1} parent=23 // pred_fallthru
          _
      $region24: #{tpu_custom_call.1} parent=5 // pred_fallthru
        _
      %p192 = scmp.le.s32.totalorder 1, %s16
      %p193 = scmp.lt.s32.totalorder %s16, 3
      %p194 = pnand %p192, %p193
      %p195 = pneg %p194
      // Predicated region
      $region29: #{tpu_custom_call.1} parent=5 // pred_check
        _
      $region30: #{tpu_custom_call.1} parent=5 // pred_check_branch
        %197 = sbr.rel (%p194) target = $region32
      $region31: #{tpu_custom_call.1} parent=5 // pred_region
        %s198 = ssub.s32 %s16, 1
        %s199 = sand.u32 %s43, 1
        %s200 = scalar_lea.sflag [#allocation4], %s199
        %s201 = sand.u32 %s43, 1
        %s202 = smul.addr %s201, 256
        %s203 = scalar_lea.vmem [#allocation3], %s202
        // Predicated region
        $region33: #{tpu_custom_call.1} parent=31 // pred_check
          %p204 = pneg %p56
        $region34: #{tpu_custom_call.1} parent=31 // pred_check_branch
          %206 = sbr.rel (%p204) target = $region36
        $region35: #{tpu_custom_call.1} parent=31 // pred_region
          %207 = dma.done %s200, 4096
        $region36: #{tpu_custom_call.1} parent=31 // pred_fallthru
          _
        // Predicated region
        $region37: #{tpu_custom_call.1} parent=31 // pred_check
          %p208 = pneg %p82
        $region38: #{tpu_custom_call.1} parent=31 // pred_check_branch
          %210 = sbr.rel (%p208) target = $region40
        $region39: #{tpu_custom_call.1} parent=31 // pred_region
          %211 = dma.done [#allocation7], 4096
        $region40: #{tpu_custom_call.1} parent=31 // pred_fallthru
          _
        %s212 = sand.u32 %s43, 1
        %s213 = scalar_lea.sflag [#allocation4], %s212
        %s214 = sand.u32 %s43, 1
        %s215 = smul.addr %s214, 256
        %s216 = scalar_lea.vmem [#allocation3], %s215
        %p217 = pneg %p56
        %p218 = pneg %p53
        %p219 = pneg %p82
        %p220 = pneg %p79
        %p221 = pneg %p103
        %p222 = pneg %p100
        %p223 = pneg %p129
        %p224 = pneg %p126
        %s225 = sand.u32 %s116, 1
        %s226 = scalar_lea.sflag [#allocation5], %s225
        %s227 = sand.u32 %s116, 1
        %s228 = smul.addr %s227, 512
        %s229 = scalar_lea.vmem [#allocation8], %s228
        %s230 = smul.u32 32, %s25
        %s231 = smul.u32 2, %s26
        %s232 = smul.u32 32, %s26
        %s233 = smul.u32 32, %s25
        %p234 = scmp.eq.s32.totalorder %s26, 0
        // Predicated region
        $region41: #{tpu_custom_call.1} parent=31 // pred_check
          %p235 = pneg %p234
        $region42: #{tpu_custom_call.1} parent=31 // pred_check_branch
          %237 = sbr.rel (%p235) target = $region44
        $region43: #{tpu_custom_call.1} parent=31 // pred_region
          %238 = vst [vmem:[#allocation2] sm:$0xff] 0.0
          %239 = vst [vmem:[#allocation2 + $0x8] sm:$0xff] 0.0
          %240 = vst [vmem:[#allocation2 + $0x10] sm:$0xff] 0.0
          %241 = vst [vmem:[#allocation2 + $0x18] sm:$0xff] 0.0
          %242 = vst [vmem:[#allocation2 + $0x20] sm:$0xff] 0.0
          %243 = vst [vmem:[#allocation2 + $0x28] sm:$0xff] 0.0
          %244 = vst [vmem:[#allocation2 + $0x30] sm:$0xff] 0.0
          %245 = vst [vmem:[#allocation2 + $0x38] sm:$0xff] 0.0
          %246 = vst [vmem:[#allocation2 + $0x40] sm:$0xff] 0.0
          %247 = vst [vmem:[#allocation2 + $0x48] sm:$0xff] 0.0
          %248 = vst [vmem:[#allocation2 + $0x50] sm:$0xff] 0.0
          %249 = vst [vmem:[#allocation2 + $0x58] sm:$0xff] 0.0
          %250 = vst [vmem:[#allocation2 + $0x60] sm:$0xff] 0.0
          %251 = vst [vmem:[#allocation2 + $0x68] sm:$0xff] 0.0
          %252 = vst [vmem:[#allocation2 + $0x70] sm:$0xff] 0.0
          %253 = vst [vmem:[#allocation2 + $0x78] sm:$0xff] 0.0
          %254 = vst [vmem:[#allocation2 + $0x80] sm:$0xff] 0.0
          %255 = vst [vmem:[#allocation2 + $0x88] sm:$0xff] 0.0
          %256 = vst [vmem:[#allocation2 + $0x90] sm:$0xff] 0.0
          %257 = vst [vmem:[#allocation2 + $0x98] sm:$0xff] 0.0
          %258 = vst [vmem:[#allocation2 + $0xa0] sm:$0xff] 0.0
          %259 = vst [vmem:[#allocation2 + $0xa8] sm:$0xff] 0.0
          %260 = vst [vmem:[#allocation2 + $0xb0] sm:$0xff] 0.0
          %261 = vst [vmem:[#allocation2 + $0xb8] sm:$0xff] 0.0
          %262 = vst [vmem:[#allocation2 + $0xc0] sm:$0xff] 0.0
          %263 = vst [vmem:[#allocation2 + $0xc8] sm:$0xff] 0.0
          %264 = vst [vmem:[#allocation2 + $0xd0] sm:$0xff] 0.0
          %265 = vst [vmem:[#allocation2 + $0xd8] sm:$0xff] 0.0
          %266 = vst [vmem:[#allocation2 + $0xe0] sm:$0xff] 0.0
          %267 = vst [vmem:[#allocation2 + $0xe8] sm:$0xff] 0.0
          %268 = vst [vmem:[#allocation2 + $0xf0] sm:$0xff] 0.0
          %269 = vst [vmem:[#allocation2 + $0xf8] sm:$0xff] 0.0
          %270 = vst [vmem:[#allocation2 + $0x100] sm:$0xff] 0.0
          %271 = vst [vmem:[#allocation2 + $0x108] sm:$0xff] 0.0
          %272 = vst [vmem:[#allocation2 + $0x110] sm:$0xff] 0.0
          %273 = vst [vmem:[#allocation2 + $0x118] sm:$0xff] 0.0
          %274 = vst [vmem:[#allocation2 + $0x120] sm:$0xff] 0.0
          %275 = vst [vmem:[#allocation2 + $0x128] sm:$0xff] 0.0
          %276 = vst [vmem:[#allocation2 + $0x130] sm:$0xff] 0.0
          %277 = vst [vmem:[#allocation2 + $0x138] sm:$0xff] 0.0
          %278 = vst [vmem:[#allocation2 + $0x140] sm:$0xff] 0.0
          %279 = vst [vmem:[#allocation2 + $0x148] sm:$0xff] 0.0
          %280 = vst [vmem:[#allocation2 + $0x150] sm:$0xff] 0.0
          %281 = vst [vmem:[#allocation2 + $0x158] sm:$0xff] 0.0
          %282 = vst [vmem:[#allocation2 + $0x160] sm:$0xff] 0.0
          %283 = vst [vmem:[#allocation2 + $0x168] sm:$0xff] 0.0
          %284 = vst [vmem:[#allocation2 + $0x170] sm:$0xff] 0.0
          %285 = vst [vmem:[#allocation2 + $0x178] sm:$0xff] 0.0
          %286 = vst [vmem:[#allocation2 + $0x180] sm:$0xff] 0.0
          %287 = vst [vmem:[#allocation2 + $0x188] sm:$0xff] 0.0
          %288 = vst [vmem:[#allocation2 + $0x190] sm:$0xff] 0.0
          %289 = vst [vmem:[#allocation2 + $0x198] sm:$0xff] 0.0
          %290 = vst [vmem:[#allocation2 + $0x1a0] sm:$0xff] 0.0
          %291 = vst [vmem:[#allocation2 + $0x1a8] sm:$0xff] 0.0
          %292 = vst [vmem:[#allocation2 + $0x1b0] sm:$0xff] 0.0
          %293 = vst [vmem:[#allocation2 + $0x1b8] sm:$0xff] 0.0
          %294 = vst [vmem:[#allocation2 + $0x1c0] sm:$0xff] 0.0
          %295 = vst [vmem:[#allocation2 + $0x1c8] sm:$0xff] 0.0
          %296 = vst [vmem:[#allocation2 + $0x1d0] sm:$0xff] 0.0
          %297 = vst [vmem:[#allocation2 + $0x1d8] sm:$0xff] 0.0
          %298 = vst [vmem:[#allocation2 + $0x1e0] sm:$0xff] 0.0
          %299 = vst [vmem:[#allocation2 + $0x1e8] sm:$0xff] 0.0
          %300 = vst [vmem:[#allocation2 + $0x1f0] sm:$0xff] 0.0
          %301 = vst [vmem:[#allocation2 + $0x1f8] sm:$0xff] 0.0
        $region44: #{tpu_custom_call.1} parent=31 // pred_fallthru
          _
        %v302 = vld [vmem:[#allocation2] sm:$0xff]
        %v303 = vld [vmem:[#allocation2 + $0x8] sm:$0xff]
        %v304 = vld [vmem:[#allocation2 + $0x10] sm:$0xff]
        %v305 = vld [vmem:[#allocation2 + $0x18] sm:$0xff]
        %v306 = vld [vmem:[#allocation2 + $0x20] sm:$0xff]
        %v307 = vld [vmem:[#allocation2 + $0x28] sm:$0xff]
        %v308 = vld [vmem:[#allocation2 + $0x30] sm:$0xff]
        %v309 = vld [vmem:[#allocation2 + $0x38] sm:$0xff]
        %v310 = vld [vmem:[#allocation2 + $0x40] sm:$0xff]
        %v311 = vld [vmem:[#allocation2 + $0x48] sm:$0xff]
        %v312 = vld [vmem:[#allocation2 + $0x50] sm:$0xff]
        %v313 = vld [vmem:[#allocation2 + $0x58] sm:$0xff]
        %v314 = vld [vmem:[#allocation2 + $0x60] sm:$0xff]
        %v315 = vld [vmem:[#allocation2 + $0x68] sm:$0xff]
        %v316 = vld [vmem:[#allocation2 + $0x70] sm:$0xff]
        %v317 = vld [vmem:[#allocation2 + $0x78] sm:$0xff]
        %v318 = vld [vmem:[#allocation2 + $0x80] sm:$0xff]
        %v319 = vld [vmem:[#allocation2 + $0x88] sm:$0xff]
        %v320 = vld [vmem:[#allocation2 + $0x90] sm:$0xff]
        %v321 = vld [vmem:[#allocation2 + $0x98] sm:$0xff]
        %v322 = vld [vmem:[#allocation2 + $0xa0] sm:$0xff]
        %v323 = vld [vmem:[#allocation2 + $0xa8] sm:$0xff]
        %v324 = vld [vmem:[#allocation2 + $0xb0] sm:$0xff]
        %v325 = vld [vmem:[#allocation2 + $0xb8] sm:$0xff]
        %v326 = vld [vmem:[#allocation2 + $0xc0] sm:$0xff]
        %v327 = vld [vmem:[#allocation2 + $0xc8] sm:$0xff]
        %v328 = vld [vmem:[#allocation2 + $0xd0] sm:$0xff]
        %v329 = vld [vmem:[#allocation2 + $0xd8] sm:$0xff]
        %v330 = vld [vmem:[#allocation2 + $0xe0] sm:$0xff]
        %v331 = vld [vmem:[#allocation2 + $0xe8] sm:$0xff]
        %v332 = vld [vmem:[#allocation2 + $0xf0] sm:$0xff]
        %v333 = vld [vmem:[#allocation2 + $0xf8] sm:$0xff]
        %v334 = vld [vmem:[#allocation2 + $0x100] sm:$0xff]
        %v335 = vld [vmem:[#allocation2 + $0x108] sm:$0xff]
        %v336 = vld [vmem:[#allocation2 + $0x110] sm:$0xff]
        %v337 = vld [vmem:[#allocation2 + $0x118] sm:$0xff]
        %v338 = vld [vmem:[#allocation2 + $0x120] sm:$0xff]
        %v339 = vld [vmem:[#allocation2 + $0x128] sm:$0xff]
        %v340 = vld [vmem:[#allocation2 + $0x130] sm:$0xff]
        %v341 = vld [vmem:[#allocation2 + $0x138] sm:$0xff]
        %v342 = vld [vmem:[#allocation2 + $0x140] sm:$0xff]
        %v343 = vld [vmem:[#allocation2 + $0x148] sm:$0xff]
        %v344 = vld [vmem:[#allocation2 + $0x150] sm:$0xff]
        %v345 = vld [vmem:[#allocation2 + $0x158] sm:$0xff]
        %v346 = vld [vmem:[#allocation2 + $0x160] sm:$0xff]
        %v347 = vld [vmem:[#allocation2 + $0x168] sm:$0xff]
        %v348 = vld [vmem:[#allocation2 + $0x170] sm:$0xff]
        %v349 = vld [vmem:[#allocation2 + $0x178] sm:$0xff]
        %v350 = vld [vmem:[#allocation2 + $0x180] sm:$0xff]
        %v351 = vld [vmem:[#allocation2 + $0x188] sm:$0xff]
        %v352 = vld [vmem:[#allocation2 + $0x190] sm:$0xff]
        %v353 = vld [vmem:[#allocation2 + $0x198] sm:$0xff]
        %v354 = vld [vmem:[#allocation2 + $0x1a0] sm:$0xff]
        %v355 = vld [vmem:[#allocation2 + $0x1a8] sm:$0xff]
        %v356 = vld [vmem:[#allocation2 + $0x1b0] sm:$0xff]
        %v357 = vld [vmem:[#allocation2 + $0x1b8] sm:$0xff]
        %v358 = vld [vmem:[#allocation2 + $0x1c0] sm:$0xff]
        %v359 = vld [vmem:[#allocation2 + $0x1c8] sm:$0xff]
        %v360 = vld [vmem:[#allocation2 + $0x1d0] sm:$0xff]
        %v361 = vld [vmem:[#allocation2 + $0x1d8] sm:$0xff]
        %v362 = vld [vmem:[#allocation2 + $0x1e0] sm:$0xff]
        %v363 = vld [vmem:[#allocation2 + $0x1e8] sm:$0xff]
        %v364 = vld [vmem:[#allocation2 + $0x1f0] sm:$0xff]
        %v365 = vld [vmem:[#allocation2 + $0x1f8] sm:$0xff]
        %v366 = vld [vmem:[%s203] sm:$0xff]
        %v367 = vld [vmem:[%s203 + $0x8] sm:$0xff]
        %v368 = vld [vmem:[%s203 + $0x10] sm:$0xff]
        %v369 = vld [vmem:[%s203 + $0x18] sm:$0xff]
        %v370 = vld [vmem:[%s203 + $0x20] sm:$0xff]
        %v371 = vld [vmem:[%s203 + $0x28] sm:$0xff]
        %v372 = vld [vmem:[%s203 + $0x30] sm:$0xff]
        %v373 = vld [vmem:[%s203 + $0x38] sm:$0xff]
        %v374 = vld [vmem:[%s203 + $0x40] sm:$0xff]
        %v375 = vld [vmem:[%s203 + $0x48] sm:$0xff]
        %v376 = vld [vmem:[%s203 + $0x50] sm:$0xff]
        %v377 = vld [vmem:[%s203 + $0x58] sm:$0xff]
        %v378 = vld [vmem:[%s203 + $0x60] sm:$0xff]
        %v379 = vld [vmem:[%s203 + $0x68] sm:$0xff]
        %v380 = vld [vmem:[%s203 + $0x70] sm:$0xff]
        %v381 = vld [vmem:[%s203 + $0x78] sm:$0xff]
        %v382 = vld [vmem:[%s203 + $0x80] sm:$0xff]
        %v383 = vld [vmem:[%s203 + $0x88] sm:$0xff]
        %v384 = vld [vmem:[%s203 + $0x90] sm:$0xff]
        %v385 = vld [vmem:[%s203 + $0x98] sm:$0xff]
        %v386 = vld [vmem:[%s203 + $0xa0] sm:$0xff]
        %v387 = vld [vmem:[%s203 + $0xa8] sm:$0xff]
        %v388 = vld [vmem:[%s203 + $0xb0] sm:$0xff]
        %v389 = vld [vmem:[%s203 + $0xb8] sm:$0xff]
        %v390 = vld [vmem:[%s203 + $0xc0] sm:$0xff]
        %v391 = vld [vmem:[%s203 + $0xc8] sm:$0xff]
        %v392 = vld [vmem:[%s203 + $0xd0] sm:$0xff]
        %v393 = vld [vmem:[%s203 + $0xd8] sm:$0xff]
        %v394 = vld [vmem:[%s203 + $0xe0] sm:$0xff]
        %v395 = vld [vmem:[%s203 + $0xe8] sm:$0xff]
        %v396 = vld [vmem:[%s203 + $0xf0] sm:$0xff]
        %v397 = vld [vmem:[%s203 + $0xf8] sm:$0xff]
        %v398 = vld [vmem:[#allocation6] sm:$0xff]
        %v399 = vld [vmem:[#allocation6 + $0x8] sm:$0xff]
        %v400 = vld [vmem:[#allocation6 + $0x10] sm:$0xff]
        %v401 = vld [vmem:[#allocation6 + $0x18] sm:$0xff]
        %v402 = vld [vmem:[#allocation6 + $0x20] sm:$0xff]
        %v403 = vld [vmem:[#allocation6 + $0x28] sm:$0xff]
        %v404 = vld [vmem:[#allocation6 + $0x30] sm:$0xff]
        %v405 = vld [vmem:[#allocation6 + $0x38] sm:$0xff]
        %v406 = vld [vmem:[#allocation6 + $0x40] sm:$0xff]
        %v407 = vld [vmem:[#allocation6 + $0x48] sm:$0xff]
        %v408 = vld [vmem:[#allocation6 + $0x50] sm:$0xff]
        %v409 = vld [vmem:[#allocation6 + $0x58] sm:$0xff]
        %v410 = vld [vmem:[#allocation6 + $0x60] sm:$0xff]
        %v411 = vld [vmem:[#allocation6 + $0x68] sm:$0xff]
        %v412 = vld [vmem:[#allocation6 + $0x70] sm:$0xff]
        %v413 = vld [vmem:[#allocation6 + $0x78] sm:$0xff]
        %v414 = vld [vmem:[#allocation6 + $0x80] sm:$0xff]
        %v415 = vld [vmem:[#allocation6 + $0x88] sm:$0xff]
        %v416 = vld [vmem:[#allocation6 + $0x90] sm:$0xff]
        %v417 = vld [vmem:[#allocation6 + $0x98] sm:$0xff]
        %v418 = vld [vmem:[#allocation6 + $0xa0] sm:$0xff]
        %v419 = vld [vmem:[#allocation6 + $0xa8] sm:$0xff]
        %v420 = vld [vmem:[#allocation6 + $0xb0] sm:$0xff]
        %v421 = vld [vmem:[#allocation6 + $0xb8] sm:$0xff]
        %v422 = vld [vmem:[#allocation6 + $0xc0] sm:$0xff]
        %v423 = vld [vmem:[#allocation6 + $0xc8] sm:$0xff]
        %v424 = vld [vmem:[#allocation6 + $0xd0] sm:$0xff]
        %v425 = vld [vmem:[#allocation6 + $0xd8] sm:$0xff]
        %v426 = vld [vmem:[#allocation6 + $0xe0] sm:$0xff]
        %v427 = vld [vmem:[#allocation6 + $0xe8] sm:$0xff]
        %v428 = vld [vmem:[#allocation6 + $0xf0] sm:$0xff]
        %v429 = vld [vmem:[#allocation6 + $0xf8] sm:$0xff]
        %v462 = vunpack.c.l.b16 %v366
        %v463 = vunpack.c.h.b16 %v366
        %v464 = vunpack.c.l.b16 %v367
        %v465 = vunpack.c.h.b16 %v367
        %v466 = vunpack.c.l.b16 %v368
        %v467 = vunpack.c.h.b16 %v368
        %v468 = vunpack.c.l.b16 %v369
        %v469 = vunpack.c.h.b16 %v369
        %v470 = vunpack.c.l.b16 %v370
        %v471 = vunpack.c.h.b16 %v370
        %v472 = vunpack.c.l.b16 %v371
        %v473 = vunpack.c.h.b16 %v371
        %v474 = vunpack.c.l.b16 %v372
        %v475 = vunpack.c.h.b16 %v372
        %v476 = vunpack.c.l.b16 %v373
        %v477 = vunpack.c.h.b16 %v373
        %v478 = vunpack.c.l.b16 %v374
        %v479 = vunpack.c.h.b16 %v374
        %v480 = vunpack.c.l.b16 %v375
        %v481 = vunpack.c.h.b16 %v375
        %v482 = vunpack.c.l.b16 %v376
        %v483 = vunpack.c.h.b16 %v376
        %v484 = vunpack.c.l.b16 %v377
        %v485 = vunpack.c.h.b16 %v377
        %v486 = vunpack.c.l.b16 %v378
        %v487 = vunpack.c.h.b16 %v378
        %v488 = vunpack.c.l.b16 %v379
        %v489 = vunpack.c.h.b16 %v379
        %v490 = vunpack.c.l.b16 %v380
        %v491 = vunpack.c.h.b16 %v380
        %v492 = vunpack.c.l.b16 %v381
        %v493 = vunpack.c.h.b16 %v381
        %v494 = vunpack.c.l.b16 %v382
        %v495 = vunpack.c.h.b16 %v382
        %v496 = vunpack.c.l.b16 %v383
        %v497 = vunpack.c.h.b16 %v383
        %v498 = vunpack.c.l.b16 %v384
        %v499 = vunpack.c.h.b16 %v384
        %v500 = vunpack.c.l.b16 %v385
        %v501 = vunpack.c.h.b16 %v385
        %v502 = vunpack.c.l.b16 %v386
        %v503 = vunpack.c.h.b16 %v386
        %v504 = vunpack.c.l.b16 %v387
        %v505 = vunpack.c.h.b16 %v387
        %v506 = vunpack.c.l.b16 %v388
        %v507 = vunpack.c.h.b16 %v388
        %v508 = vunpack.c.l.b16 %v389
        %v509 = vunpack.c.h.b16 %v389
        %v510 = vunpack.c.l.b16 %v390
        %v511 = vunpack.c.h.b16 %v390
        %v512 = vunpack.c.l.b16 %v391
        %v513 = vunpack.c.h.b16 %v391
        %v514 = vunpack.c.l.b16 %v392
        %v515 = vunpack.c.h.b16 %v392
        %v516 = vunpack.c.l.b16 %v393
        %v517 = vunpack.c.h.b16 %v393
        %v518 = vunpack.c.l.b16 %v394
        %v519 = vunpack.c.h.b16 %v394
        %v520 = vunpack.c.l.b16 %v395
        %v521 = vunpack.c.h.b16 %v395
        %v522 = vunpack.c.l.b16 %v396
        %v523 = vunpack.c.h.b16 %v396
        %v524 = vunpack.c.l.b16 %v397
        %v525 = vunpack.c.h.b16 %v397
        %v526 = vpack.c.b16 %v464, %v462
        %v527 = vpack.c.b16 %v465, %v463
        %v528 = vpack.c.b16 %v468, %v466
        %v529 = vpack.c.b16 %v469, %v467
        %v530 = vpack.c.b16 %v472, %v470
        %v531 = vpack.c.b16 %v473, %v471
        %v532 = vpack.c.b16 %v476, %v474
        %v533 = vpack.c.b16 %v477, %v475
        %v534 = vpack.c.b16 %v480, %v478
        %v535 = vpack.c.b16 %v481, %v479
        %v536 = vpack.c.b16 %v484, %v482
        %v537 = vpack.c.b16 %v485, %v483
        %v538 = vpack.c.b16 %v488, %v486
        %v539 = vpack.c.b16 %v489, %v487
        %v540 = vpack.c.b16 %v492, %v490
        %v541 = vpack.c.b16 %v493, %v491
        %v542 = vpack.c.b16 %v496, %v494
        %v543 = vpack.c.b16 %v497, %v495
        %v544 = vpack.c.b16 %v500, %v498
        %v545 = vpack.c.b16 %v501, %v499
        %v546 = vpack.c.b16 %v504, %v502
        %v547 = vpack.c.b16 %v505, %v503
        %v548 = vpack.c.b16 %v508, %v506
        %v549 = vpack.c.b16 %v509, %v507
        %v550 = vpack.c.b16 %v512, %v510
        %v551 = vpack.c.b16 %v513, %v511
        %v552 = vpack.c.b16 %v516, %v514
        %v553 = vpack.c.b16 %v517, %v515
        %v554 = vpack.c.b16 %v520, %v518
        %v555 = vpack.c.b16 %v521, %v519
        %v556 = vpack.c.b16 %v524, %v522
        %v557 = vpack.c.b16 %v525, %v523
        %v622 = vunpack.c.l.b16 %v398
        %v623 = vunpack.c.h.b16 %v398
        %v624 = vunpack.c.l.b16 %v399
        %v625 = vunpack.c.h.b16 %v399
        %v626 = vunpack.c.l.b16 %v400
        %v627 = vunpack.c.h.b16 %v400
        %v628 = vunpack.c.l.b16 %v401
        %v629 = vunpack.c.h.b16 %v401
        %v630 = vunpack.c.l.b16 %v402
        %v631 = vunpack.c.h.b16 %v402
        %v632 = vunpack.c.l.b16 %v403
        %v633 = vunpack.c.h.b16 %v403
        %v634 = vunpack.c.l.b16 %v404
        %v635 = vunpack.c.h.b16 %v404
        %v636 = vunpack.c.l.b16 %v405
        %v637 = vunpack.c.h.b16 %v405
        %v638 = vunpack.c.l.b16 %v406
        %v639 = vunpack.c.h.b16 %v406
        %v640 = vunpack.c.l.b16 %v407
        %v641 = vunpack.c.h.b16 %v407
        %v642 = vunpack.c.l.b16 %v408
        %v643 = vunpack.c.h.b16 %v408
        %v644 = vunpack.c.l.b16 %v409
        %v645 = vunpack.c.h.b16 %v409
        %v646 = vunpack.c.l.b16 %v410
        %v647 = vunpack.c.h.b16 %v410
        %v648 = vunpack.c.l.b16 %v411
        %v649 = vunpack.c.h.b16 %v411
        %v650 = vunpack.c.l.b16 %v412
        %v651 = vunpack.c.h.b16 %v412
        %v652 = vunpack.c.l.b16 %v413
        %v653 = vunpack.c.h.b16 %v413
        %v654 = vunpack.c.l.b16 %v414
        %v655 = vunpack.c.h.b16 %v414
        %v656 = vunpack.c.l.b16 %v415
        %v657 = vunpack.c.h.b16 %v415
        %v658 = vunpack.c.l.b16 %v416
        %v659 = vunpack.c.h.b16 %v416
        %v660 = vunpack.c.l.b16 %v417
        %v661 = vunpack.c.h.b16 %v417
        %v662 = vunpack.c.l.b16 %v418
        %v663 = vunpack.c.h.b16 %v418
        %v664 = vunpack.c.l.b16 %v419
        %v665 = vunpack.c.h.b16 %v419
        %v666 = vunpack.c.l.b16 %v420
        %v667 = vunpack.c.h.b16 %v420
        %v668 = vunpack.c.l.b16 %v421
        %v669 = vunpack.c.h.b16 %v421
        %v670 = vunpack.c.l.b16 %v422
        %v671 = vunpack.c.h.b16 %v422
        %v672 = vunpack.c.l.b16 %v423
        %v673 = vunpack.c.h.b16 %v423
        %v674 = vunpack.c.l.b16 %v424
        %v675 = vunpack.c.h.b16 %v424
        %v676 = vunpack.c.l.b16 %v425
        %v677 = vunpack.c.h.b16 %v425
        %v678 = vunpack.c.l.b16 %v426
        %v679 = vunpack.c.h.b16 %v426
        %v680 = vunpack.c.l.b16 %v427
        %v681 = vunpack.c.h.b16 %v427
        %v682 = vunpack.c.l.b16 %v428
        %v683 = vunpack.c.h.b16 %v428
        %v684 = vunpack.c.l.b16 %v429
        %v685 = vunpack.c.h.b16 %v429
        %v686 = vpack.c.b16 %v624, %v622
        %v687 = vpack.c.b16 %v625, %v623
        %v688 = vpack.c.b16 %v628, %v626
        %v689 = vpack.c.b16 %v629, %v627
        %v690 = vpack.c.b16 %v632, %v630
        %v691 = vpack.c.b16 %v633, %v631
        %v692 = vpack.c.b16 %v636, %v634
        %v693 = vpack.c.b16 %v637, %v635
        %v694 = vpack.c.b16 %v640, %v638
        %v695 = vpack.c.b16 %v641, %v639
        %v696 = vpack.c.b16 %v644, %v642
        %v697 = vpack.c.b16 %v645, %v643
        %v698 = vpack.c.b16 %v648, %v646
        %v699 = vpack.c.b16 %v649, %v647
        %v700 = vpack.c.b16 %v652, %v650
        %v701 = vpack.c.b16 %v653, %v651
        %v702 = vpack.c.b16 %v656, %v654
        %v703 = vpack.c.b16 %v657, %v655
        %v704 = vpack.c.b16 %v660, %v658
        %v705 = vpack.c.b16 %v661, %v659
        %v706 = vpack.c.b16 %v664, %v662
        %v707 = vpack.c.b16 %v665, %v663
        %v708 = vpack.c.b16 %v668, %v666
        %v709 = vpack.c.b16 %v669, %v667
        %v710 = vpack.c.b16 %v672, %v670
        %v711 = vpack.c.b16 %v673, %v671
        %v712 = vpack.c.b16 %v676, %v674
        %v713 = vpack.c.b16 %v677, %v675
        %v714 = vpack.c.b16 %v680, %v678
        %v715 = vpack.c.b16 %v681, %v679
        %v716 = vpack.c.b16 %v684, %v682
        %v717 = vpack.c.b16 %v685, %v683
        %750 = vmatprep.subr.bf16.mxu0 %v701
        %751 = vmatpush1.bf16.msra.mxu0 %v700
        %752 = vmatprep.subr.bf16.mxu0 %v699
        %753 = vmatpush1.bf16.msra.mxu0 %v698
        %754 = vmatprep.subr.bf16.mxu0 %v697
        %755 = vmatpush1.bf16.msra.mxu0 %v696
        %756 = vmatprep.subr.bf16.mxu0 %v695
        %757 = vmatpush1.bf16.msra.mxu0 %v694
        %758 = vmatprep.subr.bf16.mxu0 %v693
        %759 = vmatpush1.bf16.msra.mxu0 %v692
        %760 = vmatprep.subr.bf16.mxu0 %v691
        %761 = vmatpush1.bf16.msra.mxu0 %v690
        %762 = vmatprep.subr.bf16.mxu0 %v689
        %763 = vmatpush1.bf16.msra.mxu0 %v688
        %764 = vmatprep.subr.bf16.mxu0 %v687
        %765 = vmatpush1.bf16.msra.mxu0 %v686
        %766 = vmatprep.subr.bf16.mxu0 %v717
        %767 = vmatpush2.bf16.msra.mxu0 %v716
        %768 = vmatprep.subr.bf16.mxu0 %v715
        %769 = vmatpush2.bf16.msra.mxu0 %v714
        %770 = vmatprep.subr.bf16.mxu0 %v713
        %771 = vmatpush2.bf16.msra.mxu0 %v712
        %772 = vmatprep.subr.bf16.mxu0 %v711
        %773 = vmatpush2.bf16.msra.mxu0 %v710
        %774 = vmatprep.subr.bf16.mxu0 %v709
        %775 = vmatpush2.bf16.msra.mxu0 %v708
        %776 = vmatprep.subr.bf16.mxu0 %v707
        %777 = vmatpush2.bf16.msra.mxu0 %v706
        %778 = vmatprep.subr.bf16.mxu0 %v705
        %779 = vmatpush2.bf16.msra.mxu0 %v704
        %780 = vmatprep.subr.bf16.mxu0 %v703
        %781 = vmatpush2.bf16.msra.mxu0 %v702
        %782 = vmatprep.mubr.bf16.mxu0 %v527
        %783 = vmatmul.mubr.bf16.gmra.mxu0 %v526
        %v784 = vpop.f32.mrf.mxu0
        %v785 = vadd.f32 0.0, %v784
        %v786 = vpop.f32.mrf.mxu0
        %v787 = vadd.f32 0.0, %v786
        %v788 = vpop.f32.mrf.mxu0
        %v789 = vadd.f32 0.0, %v788
        %v790 = vpop.f32.mrf.mxu0
        %v791 = vadd.f32 0.0, %v790
        %792 = vmatprep.mubr.bf16.mxu0 %v529
        %793 = vmatmul.mubr.bf16.gmra.mxu0 %v528
        %v794 = vpop.f32.mrf.mxu0
        %v795 = vadd.f32 0.0, %v794
        %v796 = vpop.f32.mrf.mxu0
        %v797 = vadd.f32 0.0, %v796
        %v798 = vpop.f32.mrf.mxu0
        %v799 = vadd.f32 0.0, %v798
        %v800 = vpop.f32.mrf.mxu0
        %v801 = vadd.f32 0.0, %v800
        %802 = vmatprep.mubr.bf16.mxu0 %v531
        %803 = vmatmul.mubr.bf16.gmra.mxu0 %v530
        %v804 = vpop.f32.mrf.mxu0
        %v805 = vadd.f32 0.0, %v804
        %v806 = vpop.f32.mrf.mxu0
        %v807 = vadd.f32 0.0, %v806
        %v808 = vpop.f32.mrf.mxu0
        %v809 = vadd.f32 0.0, %v808
        %v810 = vpop.f32.mrf.mxu0
        %v811 = vadd.f32 0.0, %v810
        %812 = vmatprep.mubr.bf16.mxu0 %v533
        %813 = vmatmul.mubr.bf16.gmra.mxu0 %v532
        %v814 = vpop.f32.mrf.mxu0
        %v815 = vadd.f32 0.0, %v814
        %v816 = vpop.f32.mrf.mxu0
        %v817 = vadd.f32 0.0, %v816
        %v818 = vpop.f32.mrf.mxu0
        %v819 = vadd.f32 0.0, %v818
        %v820 = vpop.f32.mrf.mxu0
        %v821 = vadd.f32 0.0, %v820
        %822 = vmatprep.mubr.bf16.mxu0 %v535
        %823 = vmatmul.mubr.bf16.gmra.mxu0 %v534
        %v824 = vpop.f32.mrf.mxu0
        %v825 = vadd.f32 0.0, %v824
        %v826 = vpop.f32.mrf.mxu0
        %v827 = vadd.f32 0.0, %v826
        %v828 = vpop.f32.mrf.mxu0
        %v829 = vadd.f32 0.0, %v828
        %v830 = vpop.f32.mrf.mxu0
        %v831 = vadd.f32 0.0, %v830
        %832 = vmatprep.mubr.bf16.mxu0 %v537
        %833 = vmatmul.mubr.bf16.gmra.mxu0 %v536
        %v834 = vpop.f32.mrf.mxu0
        %v835 = vadd.f32 0.0, %v834
        %v836 = vpop.f32.mrf.mxu0
        %v837 = vadd.f32 0.0, %v836
        %v838 = vpop.f32.mrf.mxu0
        %v839 = vadd.f32 0.0, %v838
        %v840 = vpop.f32.mrf.mxu0
        %v841 = vadd.f32 0.0, %v840
        %842 = vmatprep.mubr.bf16.mxu0 %v539
        %843 = vmatmul.mubr.bf16.gmra.mxu0 %v538
        %v844 = vpop.f32.mrf.mxu0
        %v845 = vadd.f32 0.0, %v844
        %v846 = vpop.f32.mrf.mxu0
        %v847 = vadd.f32 0.0, %v846
        %v848 = vpop.f32.mrf.mxu0
        %v849 = vadd.f32 0.0, %v848
        %v850 = vpop.f32.mrf.mxu0
        %v851 = vadd.f32 0.0, %v850
        %852 = vmatprep.mubr.bf16.mxu0 %v541
        %853 = vmatmul.mubr.bf16.gmra.mxu0 %v540
        %v854 = vpop.f32.mrf.mxu0
        %v855 = vadd.f32 0.0, %v854
        %v856 = vpop.f32.mrf.mxu0
        %v857 = vadd.f32 0.0, %v856
        %v858 = vpop.f32.mrf.mxu0
        %v859 = vadd.f32 0.0, %v858
        %v860 = vpop.f32.mrf.mxu0
        %v861 = vadd.f32 0.0, %v860
        %862 = vmatprep.mubr.bf16.mxu0 %v543
        %863 = vmatmul.mubr.bf16.gmra.mxu0 %v542
        %v864 = vpop.f32.mrf.mxu0
        %v865 = vadd.f32 0.0, %v864
        %v866 = vpop.f32.mrf.mxu0
        %v867 = vadd.f32 0.0, %v866
        %v868 = vpop.f32.mrf.mxu0
        %v869 = vadd.f32 0.0, %v868
        %v870 = vpop.f32.mrf.mxu0
        %v871 = vadd.f32 0.0, %v870
        %872 = vmatprep.mubr.bf16.mxu0 %v545
        %873 = vmatmul.mubr.bf16.gmra.mxu0 %v544
        %v874 = vpop.f32.mrf.mxu0
        %v875 = vadd.f32 0.0, %v874
        %v876 = vpop.f32.mrf.mxu0
        %v877 = vadd.f32 0.0, %v876
        %v878 = vpop.f32.mrf.mxu0
        %v879 = vadd.f32 0.0, %v878
        %v880 = vpop.f32.mrf.mxu0
        %v881 = vadd.f32 0.0, %v880
        %882 = vmatprep.mubr.bf16.mxu0 %v547
        %883 = vmatmul.mubr.bf16.gmra.mxu0 %v546
        %v884 = vpop.f32.mrf.mxu0
        %v885 = vadd.f32 0.0, %v884
        %v886 = vpop.f32.mrf.mxu0
        %v887 = vadd.f32 0.0, %v886
        %v888 = vpop.f32.mrf.mxu0
        %v889 = vadd.f32 0.0, %v888
        %v890 = vpop.f32.mrf.mxu0
        %v891 = vadd.f32 0.0, %v890
        %892 = vmatprep.mubr.bf16.mxu0 %v549
        %893 = vmatmul.mubr.bf16.gmra.mxu0 %v548
        %v894 = vpop.f32.mrf.mxu0
        %v895 = vadd.f32 0.0, %v894
        %v896 = vpop.f32.mrf.mxu0
        %v897 = vadd.f32 0.0, %v896
        %v898 = vpop.f32.mrf.mxu0
        %v899 = vadd.f32 0.0, %v898
        %v900 = vpop.f32.mrf.mxu0
        %v901 = vadd.f32 0.0, %v900
        %902 = vmatprep.mubr.bf16.mxu0 %v551
        %903 = vmatmul.mubr.bf16.gmra.mxu0 %v550
        %v904 = vpop.f32.mrf.mxu0
        %v905 = vadd.f32 0.0, %v904
        %v906 = vpop.f32.mrf.mxu0
        %v907 = vadd.f32 0.0, %v906
        %v908 = vpop.f32.mrf.mxu0
        %v909 = vadd.f32 0.0, %v908
        %v910 = vpop.f32.mrf.mxu0
        %v911 = vadd.f32 0.0, %v910
        %912 = vmatprep.mubr.bf16.mxu0 %v553
        %913 = vmatmul.mubr.bf16.gmra.mxu0 %v552
        %v914 = vpop.f32.mrf.mxu0
        %v915 = vadd.f32 0.0, %v914
        %v916 = vpop.f32.mrf.mxu0
        %v917 = vadd.f32 0.0, %v916
        %v918 = vpop.f32.mrf.mxu0
        %v919 = vadd.f32 0.0, %v918
        %v920 = vpop.f32.mrf.mxu0
        %v921 = vadd.f32 0.0, %v920
        %922 = vmatprep.mubr.bf16.mxu0 %v555
        %923 = vmatmul.mubr.bf16.gmra.mxu0 %v554
        %v924 = vpop.f32.mrf.mxu0
        %v925 = vadd.f32 0.0, %v924
        %v926 = vpop.f32.mrf.mxu0
        %v927 = vadd.f32 0.0, %v926
        %v928 = vpop.f32.mrf.mxu0
        %v929 = vadd.f32 0.0, %v928
        %v930 = vpop.f32.mrf.mxu0
        %v931 = vadd.f32 0.0, %v930
        %932 = vmatprep.mubr.bf16.mxu0 %v557
        %933 = vmatmul.mubr.bf16.gmra.mxu0 %v556
        %v934 = vpop.f32.mrf.mxu0
        %v935 = vadd.f32 0.0, %v934
        %v936 = vpop.f32.mrf.mxu0
        %v937 = vadd.f32 0.0, %v936
        %v938 = vpop.f32.mrf.mxu0
        %v939 = vadd.f32 0.0, %v938
        %v940 = vpop.f32.mrf.mxu0
        %v941 = vadd.f32 0.0, %v940
        %942 = vdwg.mxu0
        %v943 = vadd.f32 %v302, %v785
        %v944 = vadd.f32 %v303, %v787
        %v945 = vadd.f32 %v304, %v789
        %v946 = vadd.f32 %v305, %v791
        %v947 = vadd.f32 %v306, %v795
        %v948 = vadd.f32 %v307, %v797
        %v949 = vadd.f32 %v308, %v799
        %v950 = vadd.f32 %v309, %v801
        %v951 = vadd.f32 %v310, %v805
        %v952 = vadd.f32 %v311, %v807
        %v953 = vadd.f32 %v312, %v809
        %v954 = vadd.f32 %v313, %v811
        %v955 = vadd.f32 %v314, %v815
        %v956 = vadd.f32 %v315, %v817
        %v957 = vadd.f32 %v316, %v819
        %v958 = vadd.f32 %v317, %v821
        %v959 = vadd.f32 %v318, %v825
        %v960 = vadd.f32 %v319, %v827
        %v961 = vadd.f32 %v320, %v829
        %v962 = vadd.f32 %v321, %v831
        %v963 = vadd.f32 %v322, %v835
        %v964 = vadd.f32 %v323, %v837
        %v965 = vadd.f32 %v324, %v839
        %v966 = vadd.f32 %v325, %v841
        %v967 = vadd.f32 %v326, %v845
        %v968 = vadd.f32 %v327, %v847
        %v969 = vadd.f32 %v328, %v849
        %v970 = vadd.f32 %v329, %v851
        %v971 = vadd.f32 %v330, %v855
        %v972 = vadd.f32 %v331, %v857
        %v973 = vadd.f32 %v332, %v859
        %v974 = vadd.f32 %v333, %v861
        %v975 = vadd.f32 %v334, %v865
        %v976 = vadd.f32 %v335, %v867
        %v977 = vadd.f32 %v336, %v869
        %v978 = vadd.f32 %v337, %v871
        %v979 = vadd.f32 %v338, %v875
        %v980 = vadd.f32 %v339, %v877
        %v981 = vadd.f32 %v340, %v879
        %v982 = vadd.f32 %v341, %v881
        %v983 = vadd.f32 %v342, %v885
        %v984 = vadd.f32 %v343, %v887
        %v985 = vadd.f32 %v344, %v889
        %v986 = vadd.f32 %v345, %v891
        %v987 = vadd.f32 %v346, %v895
        %v988 = vadd.f32 %v347, %v897
        %v989 = vadd.f32 %v348, %v899
        %v990 = vadd.f32 %v349, %v901
        %v991 = vadd.f32 %v350, %v905
        %v992 = vadd.f32 %v351, %v907
        %v993 = vadd.f32 %v352, %v909
        %v994 = vadd.f32 %v353, %v911
        %v995 = vadd.f32 %v354, %v915
        %v996 = vadd.f32 %v355, %v917
        %v997 = vadd.f32 %v356, %v919
        %v998 = vadd.f32 %v357, %v921
        %v999 = vadd.f32 %v358, %v925
        %v1000 = vadd.f32 %v359, %v927
        %v1001 = vadd.f32 %v360, %v929
        %v1002 = vadd.f32 %v361, %v931
        %v1003 = vadd.f32 %v362, %v935
        %v1004 = vadd.f32 %v363, %v937
        %v1005 = vadd.f32 %v364, %v939
        %v1006 = vadd.f32 %v365, %v941
        %1007 = vst [vmem:[#allocation2] sm:$0xff] %v943
        %1008 = vst [vmem:[#allocation2 + $0x8] sm:$0xff] %v944
        %1009 = vst [vmem:[#allocation2 + $0x10] sm:$0xff] %v945
        %1010 = vst [vmem:[#allocation2 + $0x18] sm:$0xff] %v946
        %1011 = vst [vmem:[#allocation2 + $0x20] sm:$0xff] %v947
        %1012 = vst [vmem:[#allocation2 + $0x28] sm:$0xff] %v948
        %1013 = vst [vmem:[#allocation2 + $0x30] sm:$0xff] %v949
        %1014 = vst [vmem:[#allocation2 + $0x38] sm:$0xff] %v950
        %1015 = vst [vmem:[#allocation2 + $0x40] sm:$0xff] %v951
        %1016 = vst [vmem:[#allocation2 + $0x48] sm:$0xff] %v952
        %1017 = vst [vmem:[#allocation2 + $0x50] sm:$0xff] %v953
        %1018 = vst [vmem:[#allocation2 + $0x58] sm:$0xff] %v954
        %1019 = vst [vmem:[#allocation2 + $0x60] sm:$0xff] %v955
        %1020 = vst [vmem:[#allocation2 + $0x68] sm:$0xff] %v956
        %1021 = vst [vmem:[#allocation2 + $0x70] sm:$0xff] %v957
        %1022 = vst [vmem:[#allocation2 + $0x78] sm:$0xff] %v958
        %1023 = vst [vmem:[#allocation2 + $0x80] sm:$0xff] %v959
        %1024 = vst [vmem:[#allocation2 + $0x88] sm:$0xff] %v960
        %1025 = vst [vmem:[#allocation2 + $0x90] sm:$0xff] %v961
        %1026 = vst [vmem:[#allocation2 + $0x98] sm:$0xff] %v962
        %1027 = vst [vmem:[#allocation2 + $0xa0] sm:$0xff] %v963
        %1028 = vst [vmem:[#allocation2 + $0xa8] sm:$0xff] %v964
        %1029 = vst [vmem:[#allocation2 + $0xb0] sm:$0xff] %v965
        %1030 = vst [vmem:[#allocation2 + $0xb8] sm:$0xff] %v966
        %1031 = vst [vmem:[#allocation2 + $0xc0] sm:$0xff] %v967
        %1032 = vst [vmem:[#allocation2 + $0xc8] sm:$0xff] %v968
        %1033 = vst [vmem:[#allocation2 + $0xd0] sm:$0xff] %v969
        %1034 = vst [vmem:[#allocation2 + $0xd8] sm:$0xff] %v970
        %1035 = vst [vmem:[#allocation2 + $0xe0] sm:$0xff] %v971
        %1036 = vst [vmem:[#allocation2 + $0xe8] sm:$0xff] %v972
        %1037 = vst [vmem:[#allocation2 + $0xf0] sm:$0xff] %v973
        %1038 = vst [vmem:[#allocation2 + $0xf8] sm:$0xff] %v974
        %1039 = vst [vmem:[#allocation2 + $0x100] sm:$0xff] %v975
        %1040 = vst [vmem:[#allocation2 + $0x108] sm:$0xff] %v976
        %1041 = vst [vmem:[#allocation2 + $0x110] sm:$0xff] %v977
        %1042 = vst [vmem:[#allocation2 + $0x118] sm:$0xff] %v978
        %1043 = vst [vmem:[#allocation2 + $0x120] sm:$0xff] %v979
        %1044 = vst [vmem:[#allocation2 + $0x128] sm:$0xff] %v980
        %1045 = vst [vmem:[#allocation2 + $0x130] sm:$0xff] %v981
        %1046 = vst [vmem:[#allocation2 + $0x138] sm:$0xff] %v982
        %1047 = vst [vmem:[#allocation2 + $0x140] sm:$0xff] %v983
        %1048 = vst [vmem:[#allocation2 + $0x148] sm:$0xff] %v984
        %1049 = vst [vmem:[#allocation2 + $0x150] sm:$0xff] %v985
        %1050 = vst [vmem:[#allocation2 + $0x158] sm:$0xff] %v986
        %1051 = vst [vmem:[#allocation2 + $0x160] sm:$0xff] %v987
        %1052 = vst [vmem:[#allocation2 + $0x168] sm:$0xff] %v988
        %1053 = vst [vmem:[#allocation2 + $0x170] sm:$0xff] %v989
        %1054 = vst [vmem:[#allocation2 + $0x178] sm:$0xff] %v990
        %1055 = vst [vmem:[#allocation2 + $0x180] sm:$0xff] %v991
        %1056 = vst [vmem:[#allocation2 + $0x188] sm:$0xff] %v992
        %1057 = vst [vmem:[#allocation2 + $0x190] sm:$0xff] %v993
        %1058 = vst [vmem:[#allocation2 + $0x198] sm:$0xff] %v994
        %1059 = vst [vmem:[#allocation2 + $0x1a0] sm:$0xff] %v995
        %1060 = vst [vmem:[#allocation2 + $0x1a8] sm:$0xff] %v996
        %1061 = vst [vmem:[#allocation2 + $0x1b0] sm:$0xff] %v997
        %1062 = vst [vmem:[#allocation2 + $0x1b8] sm:$0xff] %v998
        %1063 = vst [vmem:[#allocation2 + $0x1c0] sm:$0xff] %v999
        %1064 = vst [vmem:[#allocation2 + $0x1c8] sm:$0xff] %v1000
        %1065 = vst [vmem:[#allocation2 + $0x1d0] sm:$0xff] %v1001
        %1066 = vst [vmem:[#allocation2 + $0x1d8] sm:$0xff] %v1002
        %1067 = vst [vmem:[#allocation2 + $0x1e0] sm:$0xff] %v1003
        %1068 = vst [vmem:[#allocation2 + $0x1e8] sm:$0xff] %v1004
        %1069 = vst [vmem:[#allocation2 + $0x1f0] sm:$0xff] %v1005
        %1070 = vst [vmem:[#allocation2 + $0x1f8] sm:$0xff] %v1006
        // Predicated region
        $region45: #{tpu_custom_call.1} parent=31 // pred_check
          %p1071 = pneg %p234
        $region46: #{tpu_custom_call.1} parent=31 // pred_check_branch
          %1073 = sbr.rel (%p1071) target = $region48
        $region47: #{tpu_custom_call.1} parent=31 // pred_region
          %v1074 = vld [vmem:[#allocation2] sm:$0xff]
          %v1075 = vld [vmem:[#allocation2 + $0x8] sm:$0xff]
          %v1076 = vld [vmem:[#allocation2 + $0x10] sm:$0xff]
          %v1077 = vld [vmem:[#allocation2 + $0x18] sm:$0xff]
          %v1078 = vld [vmem:[#allocation2 + $0x20] sm:$0xff]
          %v1079 = vld [vmem:[#allocation2 + $0x28] sm:$0xff]
          %v1080 = vld [vmem:[#allocation2 + $0x30] sm:$0xff]
          %v1081 = vld [vmem:[#allocation2 + $0x38] sm:$0xff]
          %v1082 = vld [vmem:[#allocation2 + $0x40] sm:$0xff]
          %v1083 = vld [vmem:[#allocation2 + $0x48] sm:$0xff]
          %v1084 = vld [vmem:[#allocation2 + $0x50] sm:$0xff]
          %v1085 = vld [vmem:[#allocation2 + $0x58] sm:$0xff]
          %v1086 = vld [vmem:[#allocation2 + $0x60] sm:$0xff]
          %v1087 = vld [vmem:[#allocation2 + $0x68] sm:$0xff]
          %v1088 = vld [vmem:[#allocation2 + $0x70] sm:$0xff]
          %v1089 = vld [vmem:[#allocation2 + $0x78] sm:$0xff]
          %v1090 = vld [vmem:[#allocation2 + $0x80] sm:$0xff]
          %v1091 = vld [vmem:[#allocation2 + $0x88] sm:$0xff]
          %v1092 = vld [vmem:[#allocation2 + $0x90] sm:$0xff]
          %v1093 = vld [vmem:[#allocation2 + $0x98] sm:$0xff]
          %v1094 = vld [vmem:[#allocation2 + $0xa0] sm:$0xff]
          %v1095 = vld [vmem:[#allocation2 + $0xa8] sm:$0xff]
          %v1096 = vld [vmem:[#allocation2 + $0xb0] sm:$0xff]
          %v1097 = vld [vmem:[#allocation2 + $0xb8] sm:$0xff]
          %v1098 = vld [vmem:[#allocation2 + $0xc0] sm:$0xff]
          %v1099 = vld [vmem:[#allocation2 + $0xc8] sm:$0xff]
          %v1100 = vld [vmem:[#allocation2 + $0xd0] sm:$0xff]
          %v1101 = vld [vmem:[#allocation2 + $0xd8] sm:$0xff]
          %v1102 = vld [vmem:[#allocation2 + $0xe0] sm:$0xff]
          %v1103 = vld [vmem:[#allocation2 + $0xe8] sm:$0xff]
          %v1104 = vld [vmem:[#allocation2 + $0xf0] sm:$0xff]
          %v1105 = vld [vmem:[#allocation2 + $0xf8] sm:$0xff]
          %v1106 = vld [vmem:[#allocation2 + $0x100] sm:$0xff]
          %v1107 = vld [vmem:[#allocation2 + $0x108] sm:$0xff]
          %v1108 = vld [vmem:[#allocation2 + $0x110] sm:$0xff]
          %v1109 = vld [vmem:[#allocation2 + $0x118] sm:$0xff]
          %v1110 = vld [vmem:[#allocation2 + $0x120] sm:$0xff]
          %v1111 = vld [vmem:[#allocation2 + $0x128] sm:$0xff]
          %v1112 = vld [vmem:[#allocation2 + $0x130] sm:$0xff]
          %v1113 = vld [vmem:[#allocation2 + $0x138] sm:$0xff]
          %v1114 = vld [vmem:[#allocation2 + $0x140] sm:$0xff]
          %v1115 = vld [vmem:[#allocation2 + $0x148] sm:$0xff]
          %v1116 = vld [vmem:[#allocation2 + $0x150] sm:$0xff]
          %v1117 = vld [vmem:[#allocation2 + $0x158] sm:$0xff]
          %v1118 = vld [vmem:[#allocation2 + $0x160] sm:$0xff]
          %v1119 = vld [vmem:[#allocation2 + $0x168] sm:$0xff]
          %v1120 = vld [vmem:[#allocation2 + $0x170] sm:$0xff]
          %v1121 = vld [vmem:[#allocation2 + $0x178] sm:$0xff]
          %v1122 = vld [vmem:[#allocation2 + $0x180] sm:$0xff]
          %v1123 = vld [vmem:[#allocation2 + $0x188] sm:$0xff]
          %v1124 = vld [vmem:[#allocation2 + $0x190] sm:$0xff]
          %v1125 = vld [vmem:[#allocation2 + $0x198] sm:$0xff]
          %v1126 = vld [vmem:[#allocation2 + $0x1a0] sm:$0xff]
          %v1127 = vld [vmem:[#allocation2 + $0x1a8] sm:$0xff]
          %v1128 = vld [vmem:[#allocation2 + $0x1b0] sm:$0xff]
          %v1129 = vld [vmem:[#allocation2 + $0x1b8] sm:$0xff]
          %v1130 = vld [vmem:[#allocation2 + $0x1c0] sm:$0xff]
          %v1131 = vld [vmem:[#allocation2 + $0x1c8] sm:$0xff]
          %v1132 = vld [vmem:[#allocation2 + $0x1d0] sm:$0xff]
          %v1133 = vld [vmem:[#allocation2 + $0x1d8] sm:$0xff]
          %v1134 = vld [vmem:[#allocation2 + $0x1e0] sm:$0xff]
          %v1135 = vld [vmem:[#allocation2 + $0x1e8] sm:$0xff]
          %v1136 = vld [vmem:[#allocation2 + $0x1f0] sm:$0xff]
          %v1137 = vld [vmem:[#allocation2 + $0x1f8] sm:$0xff]
          %v1138 = vld [vmem:[%s2] sm:$0x3]
          %v1140 = vlaneseq
          %v1141 = vshrl.u32 %v1140, 7
          %v1142 = vsub.s32 0, %v1141
          %v1143 = vrot.slane %v1138, %v1142
          %v1144 = vlaneseq
          %v1145 = vshrl.u32 %v1144, 7
          %v1146 = vsub.s32 1, %v1145
          %v1147 = vrot.slane %v1138, %v1146
          %v1150 = vadd.f32 %v1074, %v1143
          %v1151 = vadd.f32 %v1075, %v1147
          %v1152 = vadd.f32 %v1076, %v1143
          %v1153 = vadd.f32 %v1077, %v1147
          %v1154 = vadd.f32 %v1078, %v1143
          %v1155 = vadd.f32 %v1079, %v1147
          %v1156 = vadd.f32 %v1080, %v1143
          %v1157 = vadd.f32 %v1081, %v1147
          %v1158 = vadd.f32 %v1082, %v1143
          %v1159 = vadd.f32 %v1083, %v1147
          %v1160 = vadd.f32 %v1084, %v1143
          %v1161 = vadd.f32 %v1085, %v1147
          %v1162 = vadd.f32 %v1086, %v1143
          %v1163 = vadd.f32 %v1087, %v1147
          %v1164 = vadd.f32 %v1088, %v1143
          %v1165 = vadd.f32 %v1089, %v1147
          %v1166 = vadd.f32 %v1090, %v1143
          %v1167 = vadd.f32 %v1091, %v1147
          %v1168 = vadd.f32 %v1092, %v1143
          %v1169 = vadd.f32 %v1093, %v1147
          %v1170 = vadd.f32 %v1094, %v1143
          %v1171 = vadd.f32 %v1095, %v1147
          %v1172 = vadd.f32 %v1096, %v1143
          %v1173 = vadd.f32 %v1097, %v1147
          %v1174 = vadd.f32 %v1098, %v1143
          %v1175 = vadd.f32 %v1099, %v1147
          %v1176 = vadd.f32 %v1100, %v1143
          %v1177 = vadd.f32 %v1101, %v1147
          %v1178 = vadd.f32 %v1102, %v1143
          %v1179 = vadd.f32 %v1103, %v1147
          %v1180 = vadd.f32 %v1104, %v1143
          %v1181 = vadd.f32 %v1105, %v1147
          %v1182 = vadd.f32 %v1106, %v1143
          %v1183 = vadd.f32 %v1107, %v1147
          %v1184 = vadd.f32 %v1108, %v1143
          %v1185 = vadd.f32 %v1109, %v1147
          %v1186 = vadd.f32 %v1110, %v1143
          %v1187 = vadd.f32 %v1111, %v1147
          %v1188 = vadd.f32 %v1112, %v1143
          %v1189 = vadd.f32 %v1113, %v1147
          %v1190 = vadd.f32 %v1114, %v1143
          %v1191 = vadd.f32 %v1115, %v1147
          %v1192 = vadd.f32 %v1116, %v1143
          %v1193 = vadd.f32 %v1117, %v1147
          %v1194 = vadd.f32 %v1118, %v1143
          %v1195 = vadd.f32 %v1119, %v1147
          %v1196 = vadd.f32 %v1120, %v1143
          %v1197 = vadd.f32 %v1121, %v1147
          %v1198 = vadd.f32 %v1122, %v1143
          %v1199 = vadd.f32 %v1123, %v1147
          %v1200 = vadd.f32 %v1124, %v1143
          %v1201 = vadd.f32 %v1125, %v1147
          %v1202 = vadd.f32 %v1126, %v1143
          %v1203 = vadd.f32 %v1127, %v1147
          %v1204 = vadd.f32 %v1128, %v1143
          %v1205 = vadd.f32 %v1129, %v1147
          %v1206 = vadd.f32 %v1130, %v1143
          %v1207 = vadd.f32 %v1131, %v1147
          %v1208 = vadd.f32 %v1132, %v1143
          %v1209 = vadd.f32 %v1133, %v1147
          %v1210 = vadd.f32 %v1134, %v1143
          %v1211 = vadd.f32 %v1135, %v1147
          %v1212 = vadd.f32 %v1136, %v1143
          %v1213 = vadd.f32 %v1137, %v1147
          %v1214 = vmax.f32 %v1150, 0.0
          %v1215 = vmax.f32 %v1151, 0.0
          %v1216 = vmax.f32 %v1152, 0.0
          %v1217 = vmax.f32 %v1153, 0.0
          %v1218 = vmax.f32 %v1154, 0.0
          %v1219 = vmax.f32 %v1155, 0.0
          %v1220 = vmax.f32 %v1156, 0.0
          %v1221 = vmax.f32 %v1157, 0.0
          %v1222 = vmax.f32 %v1158, 0.0
          %v1223 = vmax.f32 %v1159, 0.0
          %v1224 = vmax.f32 %v1160, 0.0
          %v1225 = vmax.f32 %v1161, 0.0
          %v1226 = vmax.f32 %v1162, 0.0
          %v1227 = vmax.f32 %v1163, 0.0
          %v1228 = vmax.f32 %v1164, 0.0
          %v1229 = vmax.f32 %v1165, 0.0
          %v1230 = vmax.f32 %v1166, 0.0
          %v1231 = vmax.f32 %v1167, 0.0
          %v1232 = vmax.f32 %v1168, 0.0
          %v1233 = vmax.f32 %v1169, 0.0
          %v1234 = vmax.f32 %v1170, 0.0
          %v1235 = vmax.f32 %v1171, 0.0
          %v1236 = vmax.f32 %v1172, 0.0
          %v1237 = vmax.f32 %v1173, 0.0
          %v1238 = vmax.f32 %v1174, 0.0
          %v1239 = vmax.f32 %v1175, 0.0
          %v1240 = vmax.f32 %v1176, 0.0
          %v1241 = vmax.f32 %v1177, 0.0
          %v1242 = vmax.f32 %v1178, 0.0
          %v1243 = vmax.f32 %v1179, 0.0
          %v1244 = vmax.f32 %v1180, 0.0
          %v1245 = vmax.f32 %v1181, 0.0
          %v1246 = vmax.f32 %v1182, 0.0
          %v1247 = vmax.f32 %v1183, 0.0
          %v1248 = vmax.f32 %v1184, 0.0
          %v1249 = vmax.f32 %v1185, 0.0
          %v1250 = vmax.f32 %v1186, 0.0
          %v1251 = vmax.f32 %v1187, 0.0
          %v1252 = vmax.f32 %v1188, 0.0
          %v1253 = vmax.f32 %v1189, 0.0
          %v1254 = vmax.f32 %v1190, 0.0
          %v1255 = vmax.f32 %v1191, 0.0
          %v1256 = vmax.f32 %v1192, 0.0
          %v1257 = vmax.f32 %v1193, 0.0
          %v1258 = vmax.f32 %v1194, 0.0
          %v1259 = vmax.f32 %v1195, 0.0
          %v1260 = vmax.f32 %v1196, 0.0
          %v1261 = vmax.f32 %v1197, 0.0
          %v1262 = vmax.f32 %v1198, 0.0
          %v1263 = vmax.f32 %v1199, 0.0
          %v1264 = vmax.f32 %v1200, 0.0
          %v1265 = vmax.f32 %v1201, 0.0
          %v1266 = vmax.f32 %v1202, 0.0
          %v1267 = vmax.f32 %v1203, 0.0
          %v1268 = vmax.f32 %v1204, 0.0
          %v1269 = vmax.f32 %v1205, 0.0
          %v1270 = vmax.f32 %v1206, 0.0
          %v1271 = vmax.f32 %v1207, 0.0
          %v1272 = vmax.f32 %v1208, 0.0
          %v1273 = vmax.f32 %v1209, 0.0
          %v1274 = vmax.f32 %v1210, 0.0
          %v1275 = vmax.f32 %v1211, 0.0
          %v1276 = vmax.f32 %v1212, 0.0
          %v1277 = vmax.f32 %v1213, 0.0
          %1278 = vst [vmem:[%s229] sm:$0xff] %v1214
          %1279 = vst [vmem:[%s229 + $0x8] sm:$0xff] %v1215
          %1280 = vst [vmem:[%s229 + $0x10] sm:$0xff] %v1216
          %1281 = vst [vmem:[%s229 + $0x18] sm:$0xff] %v1217
          %1282 = vst [vmem:[%s229 + $0x20] sm:$0xff] %v1218
          %1283 = vst [vmem:[%s229 + $0x28] sm:$0xff] %v1219
          %1284 = vst [vmem:[%s229 + $0x30] sm:$0xff] %v1220
          %1285 = vst [vmem:[%s229 + $0x38] sm:$0xff] %v1221
          %1286 = vst [vmem:[%s229 + $0x40] sm:$0xff] %v1222
          %1287 = vst [vmem:[%s229 + $0x48] sm:$0xff] %v1223
          %1288 = vst [vmem:[%s229 + $0x50] sm:$0xff] %v1224
          %1289 = vst [vmem:[%s229 + $0x58] sm:$0xff] %v1225
          %1290 = vst [vmem:[%s229 + $0x60] sm:$0xff] %v1226
          %1291 = vst [vmem:[%s229 + $0x68] sm:$0xff] %v1227
          %1292 = vst [vmem:[%s229 + $0x70] sm:$0xff] %v1228
          %1293 = vst [vmem:[%s229 + $0x78] sm:$0xff] %v1229
          %1294 = vst [vmem:[%s229 + $0x80] sm:$0xff] %v1230
          %1295 = vst [vmem:[%s229 + $0x88] sm:$0xff] %v1231
          %1296 = vst [vmem:[%s229 + $0x90] sm:$0xff] %v1232
          %1297 = vst [vmem:[%s229 + $0x98] sm:$0xff] %v1233
          %1298 = vst [vmem:[%s229 + $0xa0] sm:$0xff] %v1234
          %1299 = vst [vmem:[%s229 + $0xa8] sm:$0xff] %v1235
          %1300 = vst [vmem:[%s229 + $0xb0] sm:$0xff] %v1236
          %1301 = vst [vmem:[%s229 + $0xb8] sm:$0xff] %v1237
          %1302 = vst [vmem:[%s229 + $0xc0] sm:$0xff] %v1238
          %1303 = vst [vmem:[%s229 + $0xc8] sm:$0xff] %v1239
          %1304 = vst [vmem:[%s229 + $0xd0] sm:$0xff] %v1240
          %1305 = vst [vmem:[%s229 + $0xd8] sm:$0xff] %v1241
          %1306 = vst [vmem:[%s229 + $0xe0] sm:$0xff] %v1242
          %1307 = vst [vmem:[%s229 + $0xe8] sm:$0xff] %v1243
          %1308 = vst [vmem:[%s229 + $0xf0] sm:$0xff] %v1244
          %1309 = vst [vmem:[%s229 + $0xf8] sm:$0xff] %v1245
          %1310 = vst [vmem:[%s229 + $0x100] sm:$0xff] %v1246
          %1311 = vst [vmem:[%s229 + $0x108] sm:$0xff] %v1247
          %1312 = vst [vmem:[%s229 + $0x110] sm:$0xff] %v1248
          %1313 = vst [vmem:[%s229 + $0x118] sm:$0xff] %v1249
          %1314 = vst [vmem:[%s229 + $0x120] sm:$0xff] %v1250
          %1315 = vst [vmem:[%s229 + $0x128] sm:$0xff] %v1251
          %1316 = vst [vmem:[%s229 + $0x130] sm:$0xff] %v1252
          %1317 = vst [vmem:[%s229 + $0x138] sm:$0xff] %v1253
          %1318 = vst [vmem:[%s229 + $0x140] sm:$0xff] %v1254
          %1319 = vst [vmem:[%s229 + $0x148] sm:$0xff] %v1255
          %1320 = vst [vmem:[%s229 + $0x150] sm:$0xff] %v1256
          %1321 = vst [vmem:[%s229 + $0x158] sm:$0xff] %v1257
          %1322 = vst [vmem:[%s229 + $0x160] sm:$0xff] %v1258
          %1323 = vst [vmem:[%s229 + $0x168] sm:$0xff] %v1259
          %1324 = vst [vmem:[%s229 + $0x170] sm:$0xff] %v1260
          %1325 = vst [vmem:[%s229 + $0x178] sm:$0xff] %v1261
          %1326 = vst [vmem:[%s229 + $0x180] sm:$0xff] %v1262
          %1327 = vst [vmem:[%s229 + $0x188] sm:$0xff] %v1263
          %1328 = vst [vmem:[%s229 + $0x190] sm:$0xff] %v1264
          %1329 = vst [vmem:[%s229 + $0x198] sm:$0xff] %v1265
          %1330 = vst [vmem:[%s229 + $0x1a0] sm:$0xff] %v1266
          %1331 = vst [vmem:[%s229 + $0x1a8] sm:$0xff] %v1267
          %1332 = vst [vmem:[%s229 + $0x1b0] sm:$0xff] %v1268
          %1333 = vst [vmem:[%s229 + $0x1b8] sm:$0xff] %v1269
          %1334 = vst [vmem:[%s229 + $0x1c0] sm:$0xff] %v1270
          %1335 = vst [vmem:[%s229 + $0x1c8] sm:$0xff] %v1271
          %1336 = vst [vmem:[%s229 + $0x1d0] sm:$0xff] %v1272
          %1337 = vst [vmem:[%s229 + $0x1d8] sm:$0xff] %v1273
          %1338 = vst [vmem:[%s229 + $0x1e0] sm:$0xff] %v1274
          %1339 = vst [vmem:[%s229 + $0x1e8] sm:$0xff] %v1275
          %1340 = vst [vmem:[%s229 + $0x1f0] sm:$0xff] %v1276
          %1341 = vst [vmem:[%s229 + $0x1f8] sm:$0xff] %v1277
        $region48: #{tpu_custom_call.1} parent=31 // pred_fallthru
          _
        %s1342 = sand.u32 %s116, 1
        %s1343 = scalar_lea.sflag [#allocation5], %s1342
        %s1344 = sand.u32 %s116, 1
        %s1345 = smul.addr %s1344, 512
        %s1346 = scalar_lea.vmem [#allocation8], %s1345
        // Predicated region
        $region49: #{tpu_custom_call.1} parent=31 // pred_check
          %p1347 = pneg %p126
        $region50: #{tpu_custom_call.1} parent=31 // pred_check_branch
          %1349 = sbr.rel (%p1347) target = $region52
        $region51: #{tpu_custom_call.1} parent=31 // pred_region
          %s1350 = smul.u32 32, %s25
          %s1352 = ssub.s32 8192, 8192
          %1353 = vsyncadd %s1343, %s1352
          %s1354 = smul.addr %s1350, 2
          %s1355 = smul.addr %s1354, 128
          %s1356 = scalar_lea.hbm %s3, %s1355
          %s1357 = sshll.u32 %s1346, 4
          %s1358 = int_to_ptr.vmem [resolvable:$true] %s1357
          %1363 = dma.vmem_to_hbm [thread:$0]  %s1358, 8192, %s1356, %s1343, 256, 256, 16
        $region52: #{tpu_custom_call.1} parent=31 // pred_fallthru
          _
      $region32: #{tpu_custom_call.1} parent=5 // pred_fallthru
        _
      %p1364 = scmp.le.s32.totalorder 2, %s16
      // Predicated region
      $region53: #{tpu_custom_call.1} parent=5 // pred_check
        %p1365 = pneg %p1364
      $region54: #{tpu_custom_call.1} parent=5 // pred_check_branch
        %1367 = sbr.rel (%p1365) target = $region56
      $region55: #{tpu_custom_call.1} parent=5 // pred_region
        %s1368 = ssub.s32 %s16, 2
        // Predicated region
        $region57: #{tpu_custom_call.1} parent=55 // pred_check
          %p1369 = pneg %p132
        $region58: #{tpu_custom_call.1} parent=55 // pred_check_branch
          %1371 = sbr.rel (%p1369) target = $region60
        $region59: #{tpu_custom_call.1} parent=55 // pred_region
          %s1372 = sand.u32 %s117, 1
          %s1373 = scalar_lea.sflag [#allocation5], %s1372
          %s1374 = sand.u32 %s117, 1
          %s1375 = smul.addr %s1374, 512
          %s1376 = scalar_lea.vmem [#allocation8], %s1375
          %1377 = dma.done %s1373, 8192
        $region60: #{tpu_custom_call.1} parent=55 // pred_fallthru
          _
      $region56: #{tpu_custom_call.1} parent=5 // pred_fallthru
        _
    $region6: #{tpu_custom_call.1} parent=1 // loop_footer
      %s20 = sadd.s32 1, %s16
    $region7: #{tpu_custom_call.1} parent=1 // loop_footer_branch
      %15 = sbr.rel target = $region3
    $region8: #{tpu_custom_call.1} parent=1 // loop_exit
      _
    %1378 = vsyncpa [#allocation4], 1
    %s1379 = scalar_lea.sflag [#allocation4], 1
    %1380 = vsyncpa %s1379, 1
    %1381 = vsyncpa [#allocation7], 1
    %1382 = vsyncpa [#allocation5], 1
    %s1383 = scalar_lea.sflag [#allocation5], 1
    %1384 = vsyncpa %s1383, 1

</llo_original>
